<compile_context>
chip_gen: v5e
topology: v5e:2x2
jax: 0.10.0
libtpu: 0.0.40
codegen_flags: <defaults>
</compile_context>

<pallas_src>
import jax
import jax.numpy as jnp
from jax.experimental import pallas as pl
from jax.experimental.pallas import tpu as pltpu


def _round_up(x: int, m: int) -> int:
    return ((x + m - 1) // m) * m


# --------------------------------------------------------------------------- #
# One-time parameter packing (call at policy init, NOT every forward).
# --------------------------------------------------------------------------- #
def pack_policy_params(weights, *, discrete: bool, compute_dtype=jnp.bfloat16):
    """Zero-pad every feature dim to a multiple of 128 (lane-dense) and cast
    weights to the MXU compute dtype.

    For the discrete head, padded lanes of the LAST layer's bias are filled
    with -1e30 so the in-kernel softmax ignores them without any masking.

    Returns (flat_packed, dims, pdims) with flat_packed = [W0, b0, W1, b1, ...].
    """
    n_layers = len(weights) - 1
    dims = [weights[0][0].shape[0]] + [w.shape[1] for w, _ in weights]
    pdims = [_round_up(d, 128) for d in dims]

    flat_packed = []
    for li, (w, b) in enumerate(weights):
        wp = jnp.zeros((pdims[li], pdims[li + 1]), compute_dtype)
        wp = wp.at[:dims[li], :dims[li + 1]].set(w.astype(compute_dtype))
        fill = -1e30 if (discrete and li == n_layers) else 0.0
        bp = jnp.full((1, pdims[li + 1]), fill, jnp.float32)
        bp = bp.at[:, :dims[li + 1]].set(b.reshape(1, -1).astype(jnp.float32))
        flat_packed.extend([wp, bp])
    return flat_packed, tuple(dims), tuple(pdims)


# --------------------------------------------------------------------------- #
# Kernel body: one batch tile, weights VMEM-resident across all grid steps.
# --------------------------------------------------------------------------- #
def _make_policy_kernel(n_layers: int, discrete: bool, compute_dtype):
    def kernel(*refs):
        obs_ref = refs[0]
        wb_refs = [(refs[1 + 2 * i], refs[2 + 2 * i]) for i in range(n_layers + 1)]
        out_ref = refs[1 + 2 * (n_layers + 1)]

        h = obs_ref[...]                                    # bf16 (TB, F0_pad)
        z = None
        for li, (w_ref, b_ref) in enumerate(wb_refs):
            # bf16 operands into the MXU, f32 accumulation; bias add in f32.
            z = jnp.dot(h, w_ref[...], preferred_element_type=jnp.float32)
            z = z + b_ref[...]
            if li < n_layers:                               # hidden layers only
                h = jnp.tanh(z).astype(compute_dtype)       # f32 tanh (EUP)

        if discrete:
            # Padded lanes carry the -1e30 baked into the last bias, so
            # exp(z - m) underflows to exactly 0 there — no mask needed.
            m = jnp.max(z, axis=-1, keepdims=True)
            e = jnp.exp(z - m)
            denom = jnp.sum(e, axis=-1, keepdims=True)
            # Exact f32 normalization (fixes the approx-reciprocal sum drift).
            out_ref[...] = (e / denom).astype(out_ref.dtype)
        else:
            out_ref[...] = z.astype(out_ref.dtype)

    return kernel


# --------------------------------------------------------------------------- #
# Forward wrapper: one pallas_call, batch-gridded.
# --------------------------------------------------------------------------- #
def mlp_policy_forward(obs, flat_packed, dims, pdims, logstd=None, *,
                       discrete=False, batch_tile=512,
                       compute_dtype=jnp.bfloat16, out_dtype=jnp.bfloat16):
    """MLPPolicy forward pass.

    obs:          (B, ob_dim) float array.
    flat_packed:  output of pack_policy_params (padded bf16 weights, f32 biases).
    Returns probs (B, ac_dim) if discrete, else (mean (B, ac_dim), std (1, ac_dim)).
    """
    n_layers = len(pdims) - 2
    B = obs.shape[0]
    ob_dim, ac_dim = dims[0], dims[-1]

    # Big batch tiles: per-grid-step overhead (~0.35 us) dominates at these
    # layer widths, so use as large a tile as comfortably fits (multiple of 16
    # so bf16 sublane packing is always tile-aligned).
    TB = _round_up(min(batch_tile, _round_up(B, 16)), 16)
    Bp = _round_up(B, TB)
    n_steps = Bp // TB

    # Only per-call obs prep: cast to bf16 and zero-pad batch / feature dims.
    obs_p = jnp.pad(obs.astype(compute_dtype),
                    ((0, Bp - B), (0, pdims[0] - ob_dim)))

    in_specs = [pl.BlockSpec((TB, pdims[0]), lambda i: (i, 0))]     # tiled obs

    # Weights/biases: constant block index -> VMEM-resident across all steps.
    # If their double-buffered footprint gets big enough to threaten v7x's
    # 64 MiB VMEM, single-buffer them (safe: block index never changes).
    w_bytes = sum(int(x.size) * jnp.dtype(x.dtype).itemsize for x in flat_packed)
    w_kwargs = {}
    if 2 * w_bytes > 24 * 1024 * 1024:
        w_kwargs["pipeline_mode"] = pl.Buffered(1)
    for li in range(n_layers + 1):
        in_specs.append(pl.BlockSpec((pdims[li], pdims[li + 1]),
                                     lambda i: (0, 0), **w_kwargs))
        in_specs.append(pl.BlockSpec((1, pdims[li + 1]),
                                     lambda i: (0, 0), **w_kwargs))

    out_specs = pl.BlockSpec((TB, pdims[-1]), lambda i: (i, 0))     # lane-dense
    out_shape = jax.ShapeDtypeStruct((Bp, pdims[-1]), out_dtype)

    flops = 2 * Bp * sum(pdims[i] * pdims[i + 1] for i in range(n_layers + 1))
    transcendentals = Bp * (sum(pdims[1:-1]) + (pdims[-1] if discrete else 0))
    bytes_accessed = (obs_p.size * jnp.dtype(compute_dtype).itemsize
                      + w_bytes
                      + Bp * pdims[-1] * jnp.dtype(out_dtype).itemsize)
    cost = pl.CostEstimate(flops=int(flops),
                           transcendentals=int(transcendentals),
                           bytes_accessed=int(bytes_accessed))

    # On v7x, "parallel" on a trivial grid just duplicates the resident-weight
    # DMA across the two TensorCores; only request it when there is real work.
    dim_sem = ("parallel",) if n_steps > 1 else ("arbitrary",)

    out = pl.pallas_call(
        _make_policy_kernel(n_layers, discrete, compute_dtype),
        out_shape=out_shape,
        grid=(n_steps,),
        in_specs=in_specs,
        out_specs=out_specs,
        compiler_params=pltpu.CompilerParams(
            dimension_semantics=dim_sem,
            vmem_limit_bytes=32 * 1024 * 1024,       # safe on v5e/v6e/v7x
        ),
        cost_estimate=cost,
    )(obs_p, *flat_packed)

    out = out[:B, :ac_dim]
    if discrete:
        return out                                   # Categorical probs
    # std = exp(logstd): trivial (ac_dim,) op, computed wrapper-side.
    std = jnp.exp(logstd.reshape(1, -1).astype(jnp.float32))
    return out, std                                  # Normal mean, std


def _reference_forward(obs, weights, logstd, discrete, compute_dtype=jnp.bfloat16):
    """Pure-JAX reference with the same bf16-matmul / f32-accumulate recipe."""
    h = obs.astype(compute_dtype)
    for li, (w, b) in enumerate(weights):
        h = jnp.dot(h, w.astype(compute_dtype),
                    preferred_element_type=jnp.float32) + b.reshape(1, -1)
        if li < len(weights) - 1:
            h = jnp.tanh(h).astype(compute_dtype)
    if discrete:
        return jax.nn.softmax(h, axis=-1)
    return h, jnp.exp(logstd.reshape(1, -1))


if __name__ == "__main__":
    # Small shapes consistent with the module's constructor args.
    batch, ob_dim, ac_dim = 64, 16, 4
    n_layers, layer_size = 2, 32

    key = jax.random.PRNGKey(0)
    dims = [ob_dim] + [layer_size] * n_layers + [ac_dim]

    # Deterministic parameter init (PyTorch Linear-style uniform bounds).
    weights = []
    for i in range(n_layers + 1):
        key, kw, kb = jax.random.split(key, 3)
        bound = 1.0 / (dims[i] ** 0.5)
        w = jax.random.uniform(kw, (dims[i], dims[i + 1]), jnp.float32, -bound, bound)
        b = jax.random.uniform(kb, (dims[i + 1],), jnp.float32, -bound, bound)
        weights.append((w, b))
    logstd = jnp.zeros((ac_dim,), jnp.float32)   # nn.Parameter(torch.zeros(ac_dim))

    key, ko = jax.random.split(key)
    obs = jax.random.normal(ko, (batch, ob_dim), jnp.float32)

    # One-time packing (policy init); reused by every forward call.
    cont_packed, cdims, cpdims = pack_policy_params(weights, discrete=False)
    disc_packed, ddims, dpdims = pack_policy_params(weights, discrete=True)

    # Continuous branch: Normal(mean, std) parameters.  B=64 -> grid=(1,).
    mean, std = mlp_policy_forward(obs, cont_packed, cdims, cpdims, logstd,
                                   discrete=False)
    jax.block_until_ready((mean, std))
    ref_mean, ref_std = _reference_forward(obs, weights, logstd, discrete=False)
    assert mean.shape == (batch, ac_dim)
    # bf16 output rounding: relative error <= 2^-9 ~= 2e-3.
    assert jnp.allclose(mean.astype(jnp.float32), ref_mean,
                        atol=4e-3, rtol=8e-3), "mean mismatch"
    assert jnp.allclose(std, ref_std, atol=1e-6, rtol=1e-6), "std mismatch"

    # Discrete branch: Categorical(probs) parameters.
    probs = mlp_policy_forward(obs, disc_packed, ddims, dpdims, discrete=True)
    jax.block_until_ready(probs)
    ref_probs = _reference_forward(obs, weights, None, discrete=True)
    assert probs.shape == (batch, ac_dim)
    probs32 = probs.astype(jnp.float32)
    assert jnp.allclose(probs32, ref_probs, atol=4e-3, rtol=8e-3), "probs mismatch"
    # Rows are normalized exactly in f32 inside the kernel; only bf16 output
    # rounding (<= ~2e-3 over a row of 4 probabilities) remains.
    assert jnp.allclose(jnp.sum(probs32, axis=-1), 1.0, atol=1e-2), \
        "probs not normalized"

    print("KERNEL_OK")
</pallas_src>

<mosaic_0001>
module attributes {stable_mosaic.version = 11 : i64} {
  func.func @kernel(%arg0: i32, %arg1: memref<64x128xbf16, #tpu.memory_space<vmem>>, %arg2: memref<128x128xbf16, #tpu.memory_space<vmem>>, %arg3: memref<1x128xf32, #tpu.memory_space<vmem>>, %arg4: memref<128x128xbf16, #tpu.memory_space<vmem>>, %arg5: memref<1x128xf32, #tpu.memory_space<vmem>>, %arg6: memref<128x128xbf16, #tpu.memory_space<vmem>>, %arg7: memref<1x128xf32, #tpu.memory_space<vmem>>, %arg8: memref<64x128xbf16, #tpu.memory_space<vmem>>) attributes {dimension_semantics = [#tpu.dimension_semantics<arbitrary>], iteration_bounds = array<i64: 1>, scalar_prefetch = 0 : i64, scratch_operands = 0 : i64, tpu.core_type = #tpu.core_type<tc>, window_params = [{transform_indices = @transform_0, window_bounds = array<i64: 64, 128>}, {pipeline_mode = #tpu.pipeline_mode<synchronous>, transform_indices = @transform_1, window_bounds = array<i64: 128, 128>}, {pipeline_mode = #tpu.pipeline_mode<synchronous>, transform_indices = @transform_2, window_bounds = array<i64: 1, 128>}, {pipeline_mode = #tpu.pipeline_mode<synchronous>, transform_indices = @transform_3, window_bounds = array<i64: 128, 128>}, {pipeline_mode = #tpu.pipeline_mode<synchronous>, transform_indices = @transform_4, window_bounds = array<i64: 1, 128>}, {pipeline_mode = #tpu.pipeline_mode<synchronous>, transform_indices = @transform_5, window_bounds = array<i64: 128, 128>}, {pipeline_mode = #tpu.pipeline_mode<synchronous>, transform_indices = @transform_6, window_bounds = array<i64: 1, 128>}, {transform_indices = @transform_7, window_bounds = array<i64: 64, 128>}]} {
    %c0 = arith.constant 0 : index
    %c0_0 = arith.constant 0 : index
    %0 = vector.load %arg1[%c0, %c0_0] : memref<64x128xbf16, #tpu.memory_space<vmem>>, vector<64x128xbf16>
    %c0_1 = arith.constant 0 : index
    %c0_2 = arith.constant 0 : index
    %1 = vector.load %arg2[%c0_1, %c0_2] : memref<128x128xbf16, #tpu.memory_space<vmem>>, vector<128x128xbf16>
    %cst = arith.constant dense<0.000000e+00> : vector<64x128xf32>
    %2 = tpu.matmul %0, %1, %cst {dimension_numbers = #tpu.dot_dimension_numbers<[1], [0], [0], [1], [0, 0, 1, 1], [], []>} : vector<64x128xbf16>, vector<128x128xbf16>, vector<64x128xf32> -> vector<64x128xf32>
    %c0_3 = arith.constant 0 : index
    %c0_4 = arith.constant 0 : index
    %3 = vector.load %arg3[%c0_3, %c0_4] : memref<1x128xf32, #tpu.memory_space<vmem>>, vector<1x128xf32>
    %4 = vector.broadcast %3 : vector<1x128xf32> to vector<64x128xf32>
    %5 = arith.addf %2, %4 : vector<64x128xf32>
    %6 = math.tanh %5 : vector<64x128xf32>
    %7 = arith.truncf %6 : vector<64x128xf32> to vector<64x128xbf16>
    %c0_5 = arith.constant 0 : index
    %c0_6 = arith.constant 0 : index
    %8 = vector.load %arg4[%c0_5, %c0_6] : memref<128x128xbf16, #tpu.memory_space<vmem>>, vector<128x128xbf16>
    %cst_7 = arith.constant dense<0.000000e+00> : vector<64x128xf32>
    %9 = tpu.matmul %7, %8, %cst_7 {dimension_numbers = #tpu.dot_dimension_numbers<[1], [0], [0], [1], [0, 0, 1, 1], [], []>} : vector<64x128xbf16>, vector<128x128xbf16>, vector<64x128xf32> -> vector<64x128xf32>
    %c0_8 = arith.constant 0 : index
    %c0_9 = arith.constant 0 : index
    %10 = vector.load %arg5[%c0_8, %c0_9] : memref<1x128xf32, #tpu.memory_space<vmem>>, vector<1x128xf32>
    %11 = vector.broadcast %10 : vector<1x128xf32> to vector<64x128xf32>
    %12 = arith.addf %9, %11 : vector<64x128xf32>
    %13 = math.tanh %12 : vector<64x128xf32>
    %14 = arith.truncf %13 : vector<64x128xf32> to vector<64x128xbf16>
    %c0_10 = arith.constant 0 : index
    %c0_11 = arith.constant 0 : index
    %15 = vector.load %arg6[%c0_10, %c0_11] : memref<128x128xbf16, #tpu.memory_space<vmem>>, vector<128x128xbf16>
    %cst_12 = arith.constant dense<0.000000e+00> : vector<64x128xf32>
    %16 = tpu.matmul %14, %15, %cst_12 {dimension_numbers = #tpu.dot_dimension_numbers<[1], [0], [0], [1], [0, 0, 1, 1], [], []>} : vector<64x128xbf16>, vector<128x128xbf16>, vector<64x128xf32> -> vector<64x128xf32>
    %c0_13 = arith.constant 0 : index
    %c0_14 = arith.constant 0 : index
    %17 = vector.load %arg7[%c0_13, %c0_14] : memref<1x128xf32, #tpu.memory_space<vmem>>, vector<1x128xf32>
    %18 = vector.broadcast %17 : vector<1x128xf32> to vector<64x128xf32>
    %19 = arith.addf %16, %18 : vector<64x128xf32>
    %20 = arith.truncf %19 : vector<64x128xf32> to vector<64x128xbf16>
    %c0_15 = arith.constant 0 : index
    %c0_16 = arith.constant 0 : index
    %21 = vector.load %arg8[%c0_15, %c0_16] : memref<64x128xbf16, #tpu.memory_space<vmem>>, vector<64x128xbf16>
    tpu.vector_store %arg8[%c0_15, %c0_16], %20 {strides = array<i32>} : memref<64x128xbf16, #tpu.memory_space<vmem>>, vector<64x128xbf16>,
    return
  }
  func.func @transform_0(%arg0: i32) -> (i32, i32) {
    %c0_i32 = arith.constant 0 : i32
    %c0_i32_0 = arith.constant 0 : i32
    return %arg0, %c0_i32 : i32, i32
  }
  func.func @transform_1(%arg0: i32) -> (i32, i32) {
    %c0_i32 = arith.constant 0 : i32
    %c0_i32_0 = arith.constant 0 : i32
    %c0_i32_1 = arith.constant 0 : i32
    return %c0_i32, %c0_i32_0 : i32, i32
  }
  func.func @transform_2(%arg0: i32) -> (i32, i32) {
    %c0_i32 = arith.constant 0 : i32
    %c0_i32_0 = arith.constant 0 : i32
    %c0_i32_1 = arith.constant 0 : i32
    return %c0_i32, %c0_i32_0 : i32, i32
  }
  func.func @transform_3(%arg0: i32) -> (i32, i32) {
    %c0_i32 = arith.constant 0 : i32
    %c0_i32_0 = arith.constant 0 : i32
    %c0_i32_1 = arith.constant 0 : i32
    return %c0_i32, %c0_i32_0 : i32, i32
  }
  func.func @transform_4(%arg0: i32) -> (i32, i32) {
    %c0_i32 = arith.constant 0 : i32
    %c0_i32_0 = arith.constant 0 : i32
    %c0_i32_1 = arith.constant 0 : i32
    return %c0_i32, %c0_i32_0 : i32, i32
  }
  func.func @transform_5(%arg0: i32) -> (i32, i32) {
    %c0_i32 = arith.constant 0 : i32
    %c0_i32_0 = arith.constant 0 : i32
    %c0_i32_1 = arith.constant 0 : i32
    return %c0_i32, %c0_i32_0 : i32, i32
  }
  func.func @transform_6(%arg0: i32) -> (i32, i32) {
    %c0_i32 = arith.constant 0 : i32
    %c0_i32_0 = arith.constant 0 : i32
    %c0_i32_1 = arith.constant 0 : i32
    return %c0_i32, %c0_i32_0 : i32, i32
  }
  func.func @transform_7(%arg0: i32) -> (i32, i32) {
    %c0_i32 = arith.constant 0 : i32
    %c0_i32_0 = arith.constant 0 : i32
    return %arg0, %c0_i32 : i32, i32
  }
}

</mosaic_0001>

<llo_original>
// kernel: tpu_custom_call.1
$region0: #{tpu_custom_call.1}
  #allocation0 [shape = 'u32[]', space=smem, size = 0x4, offset = 0x4, fixed_abs, tag = 'smem constant byte address 0x4 - core index']
  #allocation1 [shape = 'u32[72,128]{1,0:T(1,128)}', space=vmem, size = 0x9000, scoped, tag = 'internal scratch']
  %s0 = inlined_call_operand.hbm [shape: bf16[64,128], index: 0, kind: input, shape index: {}]
  %s1 = inlined_call_operand.hbm [shape: bf16[128,128], index: 1, kind: input, shape index: {}]
  %s2 = inlined_call_operand.vmem [shape: f32[1,128], index: 2, kind: input, shape index: {}]
  %s3 = inlined_call_operand.hbm [shape: bf16[128,128], index: 3, kind: input, shape index: {}]
  %s4 = inlined_call_operand.vmem [shape: f32[1,128], index: 4, kind: input, shape index: {}]
  %s5 = inlined_call_operand.hbm [shape: bf16[128,128], index: 5, kind: input, shape index: {}]
  %s6 = inlined_call_operand.vmem [shape: f32[1,128], index: 6, kind: input, shape index: {}]
  %s7 = inlined_call_operand.hbm [shape: bf16[64,128], index: 7, kind: output, shape index: {}]
  %s8 = sld [smem:[#allocation0]]
  $region54: #{tpu_custom_call.1} parent=0
    _
  %s10 = ssub.s32 1, %s8
  %s11 = scalar_select 0, %s10, %s8
  $region1: #{tpu_custom_call.1} parent=0
    #allocation2 [shape = 'u8[16384]{0}', space=vmem, size = 0x4000, scoped, tag = 'input window, operand 0, single buffered']
    #allocation3 [shape = 's32[1]{0}', space=sflag, size = 0x4, scoped, tag = 'scoped memory for tpu_custom_call.1']
    #allocation4 [shape = 's32[1]{0}', space=sflag, size = 0x4, scoped, tag = 'scoped memory for tpu_custom_call.1']
    #allocation5 [shape = 'u8[32768]{0}', space=vmem, size = 0x8000, scoped, tag = 'input window, operand 1, single buffered']
    #allocation6 [shape = 's32[1]{0}', space=sflag, size = 0x4, scoped, tag = 'scoped memory for tpu_custom_call.1']
    #allocation7 [shape = 'u8[32768]{0}', space=vmem, size = 0x8000, scoped, tag = 'input window, operand 3, single buffered']
    #allocation8 [shape = 'u8[32768]{0}', space=vmem, size = 0x8000, scoped, tag = 'input window, operand 5, single buffered']
    #allocation9 [shape = 's32[1]{0}', space=sflag, size = 0x4, scoped, tag = 'scoped memory for tpu_custom_call.1']
    #allocation10 [shape = 'u8[16384]{0}', space=vmem, size = 0x4000, scoped, tag = 'output window, operand 0, single buffered']
    %12 = vsyncpa [#allocation3], 0
    %13 = vsyncpa [#allocation6], 0
    %14 = vsyncpa [#allocation9], 0
    %15 = vsyncpa [#allocation4], 0
    // Predicated region
    $region2: #{tpu_custom_call.1} parent=1 // pred_check
      _
    $region3: #{tpu_custom_call.1} parent=1 // pred_check_branch
      %17 = sbr.rel (0) target = $region5
    $region4: #{tpu_custom_call.1} parent=1 // pred_region
      %19 = vsyncadd [#allocation3], 0
      %s20 = sshll.u32 %s0, 4
      %s21 = int_to_ptr.hbm [resolvable:$true] %s20
      %s22 = sshll.u32 [#allocation2], 4
      %s23 = int_to_ptr.vmem [resolvable:$true] %s22
      %28 = dma.hbm_to_vmem [thread:$0]  %s21, 512, %s23, [#allocation3], 64, 64, 4
    $region5: #{tpu_custom_call.1} parent=1 // pred_fallthru
      _
    // Predicated region
    $region6: #{tpu_custom_call.1} parent=1 // pred_check
      _
    $region7: #{tpu_custom_call.1} parent=1 // pred_check_branch
      %30 = sbr.rel (0) target = $region9
    $region8: #{tpu_custom_call.1} parent=1 // pred_region
      %32 = vsyncadd [#allocation6], 0
      %s33 = sshll.u32 %s1, 4
      %s34 = int_to_ptr.hbm [resolvable:$true] %s33
      %s35 = sshll.u32 [#allocation5], 4
      %s36 = int_to_ptr.vmem [resolvable:$true] %s35
      %41 = dma.hbm_to_vmem [thread:$0]  %s34, 1024, %s36, [#allocation6], 64, 64, 4
    $region9: #{tpu_custom_call.1} parent=1 // pred_fallthru
      _
    // Predicated region
    $region10: #{tpu_custom_call.1} parent=1 // pred_check
      _
    $region11: #{tpu_custom_call.1} parent=1 // pred_check_branch
      %43 = sbr.rel (0) target = $region13
    $region12: #{tpu_custom_call.1} parent=1 // pred_region
      _
    $region13: #{tpu_custom_call.1} parent=1 // pred_fallthru
      _
    // Predicated region
    $region14: #{tpu_custom_call.1} parent=1 // pred_check
      _
    $region15: #{tpu_custom_call.1} parent=1 // pred_check_branch
      %45 = sbr.rel (0) target = $region17
    $region16: #{tpu_custom_call.1} parent=1 // pred_region
      %47 = vsyncadd [#allocation6], 0
      %s48 = sshll.u32 %s3, 4
      %s49 = int_to_ptr.hbm [resolvable:$true] %s48
      %s50 = sshll.u32 [#allocation7], 4
      %s51 = int_to_ptr.vmem [resolvable:$true] %s50
      %56 = dma.hbm_to_vmem [thread:$0]  %s49, 1024, %s51, [#allocation6], 64, 64, 4
    $region17: #{tpu_custom_call.1} parent=1 // pred_fallthru
      _
    // Predicated region
    $region18: #{tpu_custom_call.1} parent=1 // pred_check
      _
    $region19: #{tpu_custom_call.1} parent=1 // pred_check_branch
      %58 = sbr.rel (0) target = $region21
    $region20: #{tpu_custom_call.1} parent=1 // pred_region
      _
    $region21: #{tpu_custom_call.1} parent=1 // pred_fallthru
      _
    // Predicated region
    $region22: #{tpu_custom_call.1} parent=1 // pred_check
      _
    $region23: #{tpu_custom_call.1} parent=1 // pred_check_branch
      %60 = sbr.rel (0) target = $region25
    $region24: #{tpu_custom_call.1} parent=1 // pred_region
      %62 = vsyncadd [#allocation9], 0
      %s63 = sshll.u32 %s5, 4
      %s64 = int_to_ptr.hbm [resolvable:$true] %s63
      %s65 = sshll.u32 [#allocation8], 4
      %s66 = int_to_ptr.vmem [resolvable:$true] %s65
      %71 = dma.hbm_to_vmem [thread:$0]  %s64, 1024, %s66, [#allocation9], 64, 64, 4
    $region25: #{tpu_custom_call.1} parent=1 // pred_fallthru
      _
    // Predicated region
    $region26: #{tpu_custom_call.1} parent=1 // pred_check
      _
    $region27: #{tpu_custom_call.1} parent=1 // pred_check_branch
      %73 = sbr.rel (0) target = $region29
    $region28: #{tpu_custom_call.1} parent=1 // pred_region
      _
    $region29: #{tpu_custom_call.1} parent=1 // pred_fallthru
      _
    // Predicated region
    $region30: #{tpu_custom_call.1} parent=1 // pred_check
      _
    $region31: #{tpu_custom_call.1} parent=1 // pred_check_branch
      %75 = sbr.rel (0) target = $region33
    $region32: #{tpu_custom_call.1} parent=1 // pred_region
      %77 = dma.done [#allocation3], 512
    $region33: #{tpu_custom_call.1} parent=1 // pred_fallthru
      _
    // Predicated region
    $region34: #{tpu_custom_call.1} parent=1 // pred_check
      _
    $region35: #{tpu_custom_call.1} parent=1 // pred_check_branch
      %79 = sbr.rel (0) target = $region37
    $region36: #{tpu_custom_call.1} parent=1 // pred_region
      %81 = dma.done [#allocation6], 1024
    $region37: #{tpu_custom_call.1} parent=1 // pred_fallthru
      _
    // Predicated region
    $region38: #{tpu_custom_call.1} parent=1 // pred_check
      _
    $region39: #{tpu_custom_call.1} parent=1 // pred_check_branch
      %83 = sbr.rel (0) target = $region41
    $region40: #{tpu_custom_call.1} parent=1 // pred_region
      %85 = dma.done [#allocation6], 1024
    $region41: #{tpu_custom_call.1} parent=1 // pred_fallthru
      _
    // Predicated region
    $region42: #{tpu_custom_call.1} parent=1 // pred_check
      _
    $region43: #{tpu_custom_call.1} parent=1 // pred_check_branch
      %87 = sbr.rel (0) target = $region45
    $region44: #{tpu_custom_call.1} parent=1 // pred_region
      %89 = dma.done [#allocation9], 1024
    $region45: #{tpu_custom_call.1} parent=1 // pred_fallthru
      _
    %v90 = vld [vmem:[#allocation2] sm:$0xf]
    %v91 = vld [vmem:[#allocation2 + $0x4] sm:$0xf]
    %v92 = vld [vmem:[#allocation2 + $0x8] sm:$0xf]
    %v93 = vld [vmem:[#allocation2 + $0xc] sm:$0xf]
    %v94 = vld [vmem:[#allocation2 + $0x10] sm:$0xf]
    %v95 = vld [vmem:[#allocation2 + $0x14] sm:$0xf]
    %v96 = vld [vmem:[#allocation2 + $0x18] sm:$0xf]
    %v97 = vld [vmem:[#allocation2 + $0x1c] sm:$0xf]
    %v98 = vld [vmem:[#allocation5] sm:$0xf]
    %v99 = vld [vmem:[#allocation5 + $0x4] sm:$0xf]
    %v100 = vld [vmem:[#allocation5 + $0x8] sm:$0xf]
    %v101 = vld [vmem:[#allocation5 + $0xc] sm:$0xf]
    %v102 = vld [vmem:[#allocation5 + $0x10] sm:$0xf]
    %v103 = vld [vmem:[#allocation5 + $0x14] sm:$0xf]
    %v104 = vld [vmem:[#allocation5 + $0x18] sm:$0xf]
    %v105 = vld [vmem:[#allocation5 + $0x1c] sm:$0xf]
    %v106 = vld [vmem:[#allocation5 + $0x20] sm:$0xf]
    %v107 = vld [vmem:[#allocation5 + $0x24] sm:$0xf]
    %v108 = vld [vmem:[#allocation5 + $0x28] sm:$0xf]
    %v109 = vld [vmem:[#allocation5 + $0x2c] sm:$0xf]
    %v110 = vld [vmem:[#allocation5 + $0x30] sm:$0xf]
    %v111 = vld [vmem:[#allocation5 + $0x34] sm:$0xf]
    %v112 = vld [vmem:[#allocation5 + $0x38] sm:$0xf]
    %v113 = vld [vmem:[#allocation5 + $0x3c] sm:$0xf]
    %v114 = vld [vmem:[%s2] sm:$0x1]
    %v116 = vperm.slane %v114, 0
    %v126 = vunpack.c.l.b16 %v90
    %v127 = vunpack.c.l.b16 %v91
    %v128 = vunpack.c.l.b16 %v92
    %v129 = vunpack.c.l.b16 %v93
    %v130 = vunpack.c.l.b16 %v94
    %v131 = vunpack.c.l.b16 %v95
    %v132 = vunpack.c.l.b16 %v96
    %v133 = vunpack.c.l.b16 %v97
    %v134 = vpack.c.b16 %v127, %v126
    %v135 = vpack.c.b16 %v129, %v128
    %v136 = vpack.c.b16 %v131, %v130
    %v137 = vpack.c.b16 %v133, %v132
    %v158 = vunpack.c.l.b16 %v98
    %v159 = vunpack.c.l.b16 %v99
    %v160 = vunpack.c.l.b16 %v100
    %v161 = vunpack.c.l.b16 %v101
    %v162 = vunpack.c.l.b16 %v102
    %v163 = vunpack.c.l.b16 %v103
    %v164 = vunpack.c.l.b16 %v104
    %v165 = vunpack.c.l.b16 %v105
    %v166 = vunpack.c.l.b16 %v106
    %v167 = vunpack.c.l.b16 %v107
    %v168 = vunpack.c.l.b16 %v108
    %v169 = vunpack.c.l.b16 %v109
    %v170 = vunpack.c.l.b16 %v110
    %v171 = vunpack.c.l.b16 %v111
    %v172 = vunpack.c.l.b16 %v112
    %v173 = vunpack.c.l.b16 %v113
    %v174 = vpack.c.b16 %v159, %v158
    %v175 = vpack.c.b16 %v161, %v160
    %v176 = vpack.c.b16 %v163, %v162
    %v177 = vpack.c.b16 %v165, %v164
    %v178 = vpack.c.b16 %v167, %v166
    %v179 = vpack.c.b16 %v169, %v168
    %v180 = vpack.c.b16 %v171, %v170
    %v181 = vpack.c.b16 %v173, %v172
    %190 = vmatpush.bf16.msra.mxu0 %v181
    %191 = vmatpush.bf16.msra.mxu0 %v180
    %192 = vmatpush.bf16.msra.mxu0 %v179
    %193 = vmatpush.bf16.msra.mxu0 %v178
    %194 = vmatpush.bf16.msra.mxu0 %v177
    %195 = vmatpush.bf16.msra.mxu0 %v176
    %196 = vmatpush.bf16.msra.mxu0 %v175
    %197 = vmatpush.bf16.msra.mxu0 %v174
    %198 = vmatmul.bf16.gmra.mxu0 %v134
    %v199 = vpop.f32.mrf.mxu0
    %v200 = vadd.f32 %v116, %v199
    %v201 = vpop.f32.mrf.mxu0
    %v202 = vadd.f32 %v116, %v201
    %203 = vmatmul.bf16.gmra.mxu0 %v135
    %v204 = vpop.f32.mrf.mxu0
    %v205 = vadd.f32 %v116, %v204
    %v206 = vpop.f32.mrf.mxu0
    %v207 = vadd.f32 %v116, %v206
    %208 = vmatmul.bf16.gmra.mxu0 %v136
    %v209 = vpop.f32.mrf.mxu0
    %v210 = vadd.f32 %v116, %v209
    %v211 = vpop.f32.mrf.mxu0
    %v212 = vadd.f32 %v116, %v211
    %213 = vmatmul.bf16.gmra.mxu0 %v137
    %v214 = vpop.f32.mrf.mxu0
    %v215 = vadd.f32 %v116, %v214
    %v216 = vpop.f32.mrf.mxu0
    %v217 = vadd.f32 %v116, %v216
    %218 = vdwg.mxu0
    %v219 = vtanh.pop %v200
    %v220 = vtanh.pop %v202
    %v221 = vtanh.pop %v205
    %v222 = vtanh.pop %v207
    %v223 = vtanh.pop %v210
    %v224 = vtanh.pop %v212
    %v225 = vtanh.pop %v215
    %v226 = vtanh.pop %v217
    %v227 = vpack.c.bf16 %v220, %v219
    %v228 = vpack.c.bf16 %v222, %v221
    %v229 = vpack.c.bf16 %v224, %v223
    %v230 = vpack.c.bf16 %v226, %v225
    %v231 = vld [vmem:[#allocation7] sm:$0xf]
    %v232 = vld [vmem:[#allocation7 + $0x4] sm:$0xf]
    %v233 = vld [vmem:[#allocation7 + $0x8] sm:$0xf]
    %v234 = vld [vmem:[#allocation7 + $0xc] sm:$0xf]
    %v235 = vld [vmem:[#allocation7 + $0x10] sm:$0xf]
    %v236 = vld [vmem:[#allocation7 + $0x14] sm:$0xf]
    %v237 = vld [vmem:[#allocation7 + $0x18] sm:$0xf]
    %v238 = vld [vmem:[#allocation7 + $0x1c] sm:$0xf]
    %v239 = vld [vmem:[#allocation7 + $0x20] sm:$0xf]
    %v240 = vld [vmem:[#allocation7 + $0x24] sm:$0xf]
    %v241 = vld [vmem:[#allocation7 + $0x28] sm:$0xf]
    %v242 = vld [vmem:[#allocation7 + $0x2c] sm:$0xf]
    %v243 = vld [vmem:[#allocation7 + $0x30] sm:$0xf]
    %v244 = vld [vmem:[#allocation7 + $0x34] sm:$0xf]
    %v245 = vld [vmem:[#allocation7 + $0x38] sm:$0xf]
    %v246 = vld [vmem:[#allocation7 + $0x3c] sm:$0xf]
    %v247 = vld [vmem:[%s4] sm:$0x1]
    %v249 = vperm.slane %v247, 0
    %v267 = vunpack.c.l.b16 %v231
    %v268 = vunpack.c.l.b16 %v232
    %v269 = vunpack.c.l.b16 %v233
    %v270 = vunpack.c.l.b16 %v234
    %v271 = vunpack.c.l.b16 %v235
    %v272 = vunpack.c.l.b16 %v236
    %v273 = vunpack.c.l.b16 %v237
    %v274 = vunpack.c.l.b16 %v238
    %v275 = vunpack.c.l.b16 %v239
    %v276 = vunpack.c.l.b16 %v240
    %v277 = vunpack.c.l.b16 %v241
    %v278 = vunpack.c.l.b16 %v242
    %v279 = vunpack.c.l.b16 %v243
    %v280 = vunpack.c.l.b16 %v244
    %v281 = vunpack.c.l.b16 %v245
    %v282 = vunpack.c.l.b16 %v246
    %v283 = vpack.c.b16 %v268, %v267
    %v284 = vpack.c.b16 %v270, %v269
    %v285 = vpack.c.b16 %v272, %v271
    %v286 = vpack.c.b16 %v274, %v273
    %v287 = vpack.c.b16 %v276, %v275
    %v288 = vpack.c.b16 %v278, %v277
    %v289 = vpack.c.b16 %v280, %v279
    %v290 = vpack.c.b16 %v282, %v281
    %299 = vmatpush.bf16.msra.mxu0 %v290
    %300 = vmatpush.bf16.msra.mxu0 %v289
    %301 = vmatpush.bf16.msra.mxu0 %v288
    %302 = vmatpush.bf16.msra.mxu0 %v287
    %303 = vmatpush.bf16.msra.mxu0 %v286
    %304 = vmatpush.bf16.msra.mxu0 %v285
    %305 = vmatpush.bf16.msra.mxu0 %v284
    %306 = vmatpush.bf16.msra.mxu0 %v283
    %307 = vmatmul.bf16.gmra.mxu0 %v227
    %v308 = vpop.f32.mrf.mxu0
    %v309 = vadd.f32 %v249, %v308
    %v310 = vpop.f32.mrf.mxu0
    %v311 = vadd.f32 %v249, %v310
    %312 = vmatmul.bf16.gmra.mxu0 %v228
    %v313 = vpop.f32.mrf.mxu0
    %v314 = vadd.f32 %v249, %v313
    %v315 = vpop.f32.mrf.mxu0
    %v316 = vadd.f32 %v249, %v315
    %317 = vmatmul.bf16.gmra.mxu0 %v229
    %v318 = vpop.f32.mrf.mxu0
    %v319 = vadd.f32 %v249, %v318
    %v320 = vpop.f32.mrf.mxu0
    %v321 = vadd.f32 %v249, %v320
    %322 = vmatmul.bf16.gmra.mxu0 %v230
    %v323 = vpop.f32.mrf.mxu0
    %v324 = vadd.f32 %v249, %v323
    %v325 = vpop.f32.mrf.mxu0
    %v326 = vadd.f32 %v249, %v325
    %327 = vdwg.mxu0
    %v328 = vtanh.pop %v309
    %v329 = vtanh.pop %v311
    %v330 = vtanh.pop %v314
    %v331 = vtanh.pop %v316
    %v332 = vtanh.pop %v319
    %v333 = vtanh.pop %v321
    %v334 = vtanh.pop %v324
    %v335 = vtanh.pop %v326
    %v336 = vpack.c.bf16 %v329, %v328
    %v337 = vpack.c.bf16 %v331, %v330
    %v338 = vpack.c.bf16 %v333, %v332
    %v339 = vpack.c.bf16 %v335, %v334
    %v340 = vld [vmem:[#allocation8] sm:$0xf]
    %v341 = vld [vmem:[#allocation8 + $0x4] sm:$0xf]
    %v342 = vld [vmem:[#allocation8 + $0x8] sm:$0xf]
    %v343 = vld [vmem:[#allocation8 + $0xc] sm:$0xf]
    %v344 = vld [vmem:[#allocation8 + $0x10] sm:$0xf]
    %v345 = vld [vmem:[#allocation8 + $0x14] sm:$0xf]
    %v346 = vld [vmem:[#allocation8 + $0x18] sm:$0xf]
    %v347 = vld [vmem:[#allocation8 + $0x1c] sm:$0xf]
    %v348 = vld [vmem:[#allocation8 + $0x20] sm:$0xf]
    %v349 = vld [vmem:[#allocation8 + $0x24] sm:$0xf]
    %v350 = vld [vmem:[#allocation8 + $0x28] sm:$0xf]
    %v351 = vld [vmem:[#allocation8 + $0x2c] sm:$0xf]
    %v352 = vld [vmem:[#allocation8 + $0x30] sm:$0xf]
    %v353 = vld [vmem:[#allocation8 + $0x34] sm:$0xf]
    %v354 = vld [vmem:[#allocation8 + $0x38] sm:$0xf]
    %v355 = vld [vmem:[#allocation8 + $0x3c] sm:$0xf]
    %v356 = vld [vmem:[%s6] sm:$0x1]
    %v358 = vperm.slane %v356, 0
    %v376 = vunpack.c.l.b16 %v340
    %v377 = vunpack.c.l.b16 %v341
    %v378 = vunpack.c.l.b16 %v342
    %v379 = vunpack.c.l.b16 %v343
    %v380 = vunpack.c.l.b16 %v344
    %v381 = vunpack.c.l.b16 %v345
    %v382 = vunpack.c.l.b16 %v346
    %v383 = vunpack.c.l.b16 %v347
    %v384 = vunpack.c.l.b16 %v348
    %v385 = vunpack.c.l.b16 %v349
    %v386 = vunpack.c.l.b16 %v350
    %v387 = vunpack.c.l.b16 %v351
    %v388 = vunpack.c.l.b16 %v352
    %v389 = vunpack.c.l.b16 %v353
    %v390 = vunpack.c.l.b16 %v354
    %v391 = vunpack.c.l.b16 %v355
    %v392 = vpack.c.b16 %v377, %v376
    %v393 = vpack.c.b16 %v379, %v378
    %v394 = vpack.c.b16 %v381, %v380
    %v395 = vpack.c.b16 %v383, %v382
    %v396 = vpack.c.b16 %v385, %v384
    %v397 = vpack.c.b16 %v387, %v386
    %v398 = vpack.c.b16 %v389, %v388
    %v399 = vpack.c.b16 %v391, %v390
    %408 = vmatpush.bf16.msra.mxu0 %v399
    %409 = vmatpush.bf16.msra.mxu0 %v398
    %410 = vmatpush.bf16.msra.mxu0 %v397
    %411 = vmatpush.bf16.msra.mxu0 %v396
    %412 = vmatpush.bf16.msra.mxu0 %v395
    %413 = vmatpush.bf16.msra.mxu0 %v394
    %414 = vmatpush.bf16.msra.mxu0 %v393
    %415 = vmatpush.bf16.msra.mxu0 %v392
    %416 = vmatmul.bf16.gmra.mxu0 %v336
    %v417 = vpop.f32.mrf.mxu0
    %v418 = vadd.f32 %v358, %v417
    %v419 = vpop.f32.mrf.mxu0
    %v420 = vadd.f32 %v358, %v419
    %421 = vmatmul.bf16.gmra.mxu0 %v337
    %v422 = vpop.f32.mrf.mxu0
    %v423 = vadd.f32 %v358, %v422
    %v424 = vpop.f32.mrf.mxu0
    %v425 = vadd.f32 %v358, %v424
    %426 = vmatmul.bf16.gmra.mxu0 %v338
    %v427 = vpop.f32.mrf.mxu0
    %v428 = vadd.f32 %v358, %v427
    %v429 = vpop.f32.mrf.mxu0
    %v430 = vadd.f32 %v358, %v429
    %431 = vmatmul.bf16.gmra.mxu0 %v339
    %v432 = vpop.f32.mrf.mxu0
    %v433 = vadd.f32 %v358, %v432
    %v434 = vpop.f32.mrf.mxu0
    %v435 = vadd.f32 %v358, %v434
    %436 = vdwg.mxu0
    %v437 = vpack.c.bf16 %v418, %v418
    %v438 = vpack.c.bf16 %v420, %v420
    %v439 = vpack.c.bf16 %v423, %v423
    %v440 = vpack.c.bf16 %v425, %v425
    %v441 = vpack.c.bf16 %v428, %v428
    %v442 = vpack.c.bf16 %v430, %v430
    %v443 = vpack.c.bf16 %v433, %v433
    %v444 = vpack.c.bf16 %v435, %v435
    %445 = vst [vmem:[#allocation10] sm:$0xf] %v437
    %446 = vst [vmem:[#allocation10 + $0x4] sm:$0xf] %v438
    %447 = vst [vmem:[#allocation10 + $0x8] sm:$0xf] %v439
    %448 = vst [vmem:[#allocation10 + $0xc] sm:$0xf] %v440
    %449 = vst [vmem:[#allocation10 + $0x10] sm:$0xf] %v441
    %450 = vst [vmem:[#allocation10 + $0x14] sm:$0xf] %v442
    %451 = vst [vmem:[#allocation10 + $0x18] sm:$0xf] %v443
    %452 = vst [vmem:[#allocation10 + $0x1c] sm:$0xf] %v444
    // Predicated region
    $region46: #{tpu_custom_call.1} parent=1 // pred_check
      _
    $region47: #{tpu_custom_call.1} parent=1 // pred_check_branch
      %454 = sbr.rel (0) target = $region49
    $region48: #{tpu_custom_call.1} parent=1 // pred_region
      %456 = vsyncadd [#allocation4], 0
      %s457 = sshll.u32 [#allocation10], 4
      %s458 = int_to_ptr.vmem [resolvable:$true] %s457
      %s459 = sshll.u32 %s7, 4
      %s460 = int_to_ptr.hbm [resolvable:$true] %s459
      %465 = dma.vmem_to_hbm [thread:$0]  %s458, 512, %s460, [#allocation4], 64, 64, 4
    $region49: #{tpu_custom_call.1} parent=1 // pred_fallthru
      _
    // Predicated region
    $region50: #{tpu_custom_call.1} parent=1 // pred_check
      _
    $region51: #{tpu_custom_call.1} parent=1 // pred_check_branch
      %467 = sbr.rel (0) target = $region53
    $region52: #{tpu_custom_call.1} parent=1 // pred_region
      %469 = dma.done [#allocation4], 512
    $region53: #{tpu_custom_call.1} parent=1 // pred_fallthru
      _
    %470 = vsyncpa [#allocation3], 1
    %471 = vsyncpa [#allocation6], 1
    %472 = vsyncpa [#allocation9], 1
    %473 = vsyncpa [#allocation4], 1

</llo_original>
